<compile_context>
chip_gen: v5e
topology: v5e:2x2
jax: 0.10.0
libtpu: 0.0.40
codegen_flags: <defaults>
</compile_context>

<pallas_src>
import jax
import jax.numpy as jnp
from jax.experimental import pallas as pl
from jax.experimental.pallas import tpu as pltpu


LENGTH = 9  # matches the smart_init branch of the PyTorch module

# Deterministic "smart_init" weights for length == 9, pre-shaped ONCE at
# module-init time to the (1, L) row the kernel consumes (no per-call shaping).
SMART_INIT_WEIGHTS_9 = jnp.array(
    [10.59154438, 6.49373517, 6.33886868, 46.2918886, -204.60743457,
     54.47196403, 49.93853715, -18.88485571, -26.46835565],
    dtype=jnp.float32,
).reshape(1, LENGTH)


def _dot_kernel(x_ref, w_ref, o_ref):
    # x_ref / w_ref: (1, L) f32 rows resident in VMEM (full-array blocks).
    # o_ref: (1, 1) f32 in SMEM (avoids masked sub-lane vector store + tile
    # writeback DMA for a single scalar).
    # VPU elementwise multiply + XLU cross-lane reduce; no MXU for 9 MACs.
    o_ref[0, 0] = jnp.sum(x_ref[...] * w_ref[...])


@jax.jit
def _dot_forward(x_row, w_row):
    # x_row, w_row: (1, L) float32.
    out = pl.pallas_call(
        _dot_kernel,
        out_shape=jax.ShapeDtypeStruct((1, 1), jnp.float32),
        # Gridless single invocation; whole (tiny) arrays resident in VMEM.
        in_specs=[
            pl.BlockSpec(memory_space=pltpu.MemorySpace.VMEM),
            pl.BlockSpec(memory_space=pltpu.MemorySpace.VMEM),
        ],
        out_specs=pl.BlockSpec(memory_space=pltpu.MemorySpace.SMEM),
    )(x_row, w_row)
    # Reshape to scalar inside the jitted wrapper so it fuses with the custom
    # call (no separate post-call gather/slice HLO).
    return out.reshape(())


def dot_product_model(x, weights_row=SMART_INIT_WEIGHTS_9):
    """Computes dot(x, weights) with a Pallas TPU kernel.

    x:           (L,) float-castable vector (the numpy X in the PyTorch module)
    weights_row: (1, L) float32 parameter row (pre-shaped at init time)
    returns:     scalar float32
    """
    x_row = jnp.asarray(x, dtype=jnp.float32).reshape(1, -1)
    assert x_row.shape == weights_row.shape
    return _dot_forward(x_row, weights_row)


if __name__ == "__main__":
    # Deterministic example input X (stand-in for the numpy array passed to forward).
    key = jax.random.PRNGKey(0)
    x = jax.random.normal(key, (LENGTH,), dtype=jnp.float32)

    result = dot_product_model(x)
    result = jax.block_until_ready(result)

    # Sanity check against plain JAX reference (same semantics as torch.dot).
    ref = jnp.dot(x, SMART_INIT_WEIGHTS_9.reshape(-1))
    assert jnp.allclose(result, ref, rtol=1e-5, atol=1e-5), (result, ref)

    print("KERNEL_OK")
</pallas_src>

<mosaic_0001>
module attributes {stable_mosaic.version = 11 : i64} {
  func.func @_dot_kernel(%arg0: memref<1x9xf32, #tpu.memory_space<vmem>>, %arg1: memref<1x9xf32, #tpu.memory_space<vmem>>, %arg2: memref<1x1xf32, #tpu.memory_space<smem>>) attributes {dimension_semantics = [], scalar_prefetch = 0 : i64, scratch_operands = 0 : i64, tpu.core_type = #tpu.core_type<tc>} {
    %c0 = arith.constant 0 : index
    %c0_0 = arith.constant 0 : index
    %0 = vector.load %arg0[%c0, %c0_0] : memref<1x9xf32, #tpu.memory_space<vmem>>, vector<1x9xf32>
    %c0_1 = arith.constant 0 : index
    %c0_2 = arith.constant 0 : index
    %1 = vector.load %arg1[%c0_1, %c0_2] : memref<1x9xf32, #tpu.memory_space<vmem>>, vector<1x9xf32>
    %2 = arith.mulf %0, %1 : vector<1x9xf32>
    %3 = vector.shape_cast %2 : vector<1x9xf32> to vector<1x1x9xf32>
    %cst = arith.constant dense<0.000000e+00> : vector<1xf32>
    %4 = vector.multi_reduction <add>, %3, %cst [1, 2] : vector<1x1x9xf32> to vector<1xf32>
    %5 = vector.shape_cast %4 : vector<1xf32> to vector<1x1x1xf32>
    %6 = vector.extract %5[0, 0, 0] : f32 from vector<1x1x1xf32>
    %c0_3 = arith.constant 0 : index
    %c0_4 = arith.constant 0 : index
    %7 = memref.load %arg2[%c0_3, %c0_4] : memref<1x1xf32, #tpu.memory_space<smem>>
    memref.store %6, %arg2[%c0_3, %c0_4] : memref<1x1xf32, #tpu.memory_space<smem>>
    return
  }
}

</mosaic_0001>

<llo_original>
// kernel: _dot_forward.1
$region0: #{_dot_forward.1}
  #allocation0 [shape = 'u32[]', space=smem, size = 0x4, offset = 0x4, fixed_abs, tag = 'smem constant byte address 0x4 - core index']
  #allocation1 [shape = 'u32[72,128]{1,0:T(1,128)}', space=vmem, size = 0x9000, scoped, tag = 'internal scratch']
  %s0 = inlined_call_operand.hbm [shape: f32[1,9], index: 0, kind: input, shape index: {}]
  %s1 = inlined_call_operand.hbm [shape: f32[1,9], index: 1, kind: input, shape index: {}]
  %s2 = inlined_call_operand.hbm [shape: f32[1,1], index: 2, kind: output, shape index: {}]
  %s3 = sld [smem:[#allocation0]]
  $region26: #{_dot_forward.1} parent=0
    _
  %s5 = ssub.s32 1, %s3
  %s6 = scalar_select 0, %s5, %s3
  $region1: #{_dot_forward.1} parent=0
    #allocation2 [shape = 'u8[512]{0}', space=vmem, size = 0x400, scoped, tag = 'input window, operand 0, single buffered']
    #allocation3 [shape = 's32[1]{0}', space=sflag, size = 0x4, scoped, tag = 'scoped memory for _dot_forward.1']
    #allocation4 [shape = 's32[1]{0}', space=sflag, size = 0x4, scoped, tag = 'scoped memory for _dot_forward.1']
    #allocation5 [shape = 'u8[512]{0}', space=vmem, size = 0x400, scoped, tag = 'input window, operand 1, single buffered']
    #allocation6 [shape = 's32[1]{0}', space=sflag, size = 0x4, scoped, tag = 'scoped memory for _dot_forward.1']
    #allocation7 [shape = 'u8[512]{0}', space=smem, size = 0x200, scoped, tag = 'output window, operand 0, single buffered']
    %7 = vsyncpa [#allocation3], 0
    %8 = vsyncpa [#allocation6], 0
    %9 = vsyncpa [#allocation4], 0
    // Predicated region
    $region2: #{_dot_forward.1} parent=1 // pred_check
      _
    $region3: #{_dot_forward.1} parent=1 // pred_check_branch
      %11 = sbr.rel (0) target = $region5
    $region4: #{_dot_forward.1} parent=1 // pred_region
      %13 = vsyncadd [#allocation3], 0
      %s15 = sshll.u32 %s0, 4
      %s16 = int_to_ptr.hbm [resolvable:$true] %s15
      %s17 = sshll.u32 [#allocation2], 4
      %s18 = int_to_ptr.vmem [resolvable:$true] %s17
      %20 = dma.hbm_to_vmem [thread:$0]  %s16, 16, %s18, [#allocation3]
    $region5: #{_dot_forward.1} parent=1 // pred_fallthru
      _
    // Predicated region
    $region6: #{_dot_forward.1} parent=1 // pred_check
      _
    $region7: #{_dot_forward.1} parent=1 // pred_check_branch
      %22 = sbr.rel (0) target = $region9
    $region8: #{_dot_forward.1} parent=1 // pred_region
      %24 = vsyncadd [#allocation6], 0
      %s26 = sshll.u32 %s1, 4
      %s27 = int_to_ptr.hbm [resolvable:$true] %s26
      %s28 = sshll.u32 [#allocation5], 4
      %s29 = int_to_ptr.vmem [resolvable:$true] %s28
      %31 = dma.hbm_to_vmem [thread:$0]  %s27, 16, %s29, [#allocation6]
    $region9: #{_dot_forward.1} parent=1 // pred_fallthru
      _
    // Predicated region
    $region10: #{_dot_forward.1} parent=1 // pred_check
      _
    $region11: #{_dot_forward.1} parent=1 // pred_check_branch
      %33 = sbr.rel (0) target = $region13
    $region12: #{_dot_forward.1} parent=1 // pred_region
      %35 = dma.done [#allocation3], 16
    $region13: #{_dot_forward.1} parent=1 // pred_fallthru
      _
    // Predicated region
    $region14: #{_dot_forward.1} parent=1 // pred_check
      _
    $region15: #{_dot_forward.1} parent=1 // pred_check_branch
      %37 = sbr.rel (0) target = $region17
    $region16: #{_dot_forward.1} parent=1 // pred_region
      %39 = dma.done [#allocation6], 16
    $region17: #{_dot_forward.1} parent=1 // pred_fallthru
      _
    %v40 = vld [vmem:[#allocation2] sm:$0x1]
    %v41 = vld [vmem:[#allocation5] sm:$0x1]
    %v42 = vmul.f32 %v40, %v41
    %vm43 = vcmask 65536
    %v44 = vsel %vm43, %v42, 0.0
    %45 = vadd.xlane.f32.xlu0 %v44
    %v46 = vpop.xlane.xlu0 %45
    %v47 = vrot.slane %v46, 4
    %v48 = vadd.f32 %v46, %v47
    %v49 = vrot.slane %v48, 2
    %v50 = vadd.f32 %v48, %v49
    %v51 = vrot.slane %v50, 1
    %v52 = vadd.f32 %v50, %v51
    %s53 = vtos %v52
    %s54 = scalar_lea.smem [#allocation7], 0
    %55 = sst [smem:[%s54]] %s53
    // Predicated region
    $region18: #{_dot_forward.1} parent=1 // pred_check
      _
    $region19: #{_dot_forward.1} parent=1 // pred_check_branch
      %57 = sbr.rel (0) target = $region21
    $region20: #{_dot_forward.1} parent=1 // pred_region
      %59 = vsyncadd [#allocation4], 0
      %s61 = sshll.u32 %s2, 4
      %s62 = int_to_ptr.hbm [resolvable:$true] %s61
      %64 = dma.smem_to_hbm [#allocation7], 16, %s62, [#allocation4]
    $region21: #{_dot_forward.1} parent=1 // pred_fallthru
      _
    // Predicated region
    $region22: #{_dot_forward.1} parent=1 // pred_check
      _
    $region23: #{_dot_forward.1} parent=1 // pred_check_branch
      %66 = sbr.rel (0) target = $region25
    $region24: #{_dot_forward.1} parent=1 // pred_region
      %68 = dma.done [#allocation4], 16
    $region25: #{_dot_forward.1} parent=1 // pred_fallthru
      _
    %69 = sfence
    %70 = vsyncpa [#allocation3], 1
    %71 = vsyncpa [#allocation6], 1
    %72 = vsyncpa [#allocation4], 1

</llo_original>
